<compile_context>
chip_gen: v7x
topology: tpu7x:2x2x1
jax: 0.10.0
libtpu: 0.0.40
codegen_flags: <defaults>
</compile_context>

<pallas_src>
import jax
import jax.numpy as jnp
from jax.experimental import pallas as pl
from jax.experimental.pallas import tpu as pltpu


def _round_up(x, m):
    return ((x + m - 1) // m) * m


def _cdiv(a, b):
    return (a + b - 1) // b


def _choose_tile_b(batch, f_in, itemsize, tile_b=None):
    """Batch-tile rows, derived from VMEM arithmetic (not a hard-coded cap)."""
    b_pad8 = _round_up(batch, 8)
    if tile_b is None:
        # Double-buffered x tile + (conservatively lane-padded) f32 (TB,1) out tile,
        # kept under ~12 MiB so we fit even v5e's 16 MiB default scoped VMEM.
        vmem_budget = 12 * 1024 * 1024
        per_row_bytes = 2 * f_in * itemsize + 2 * 128 * 4
        tile_b = max(128, min(32768, (vmem_budget // per_row_bytes) // 128 * 128))
    tb = max(8, min(_round_up(tile_b, 8), b_pad8))
    # v7x megacore: with a big enough batch, keep >= 2 grid steps so the "parallel"
    # axis can be split across both TensorCores (harmless extra step on v5e/v6e).
    if batch > 1024 and _cdiv(b_pad8, tb) < 2:
        tb = _round_up(_cdiv(b_pad8, 2), 8)
    return tb


def value_net_kernel(x_ref, w1_ref, b1_ref, w2_ref, b2_ref, o_ref):
    # x_ref : (TB, f_in)      activation tile, native [batch, feature] layout
    # w1_ref: (f_in, hidden)  fc1 weight, pre-transposed (VMEM-resident across grid)
    # b1_ref: (1, hidden)     fc1 bias row (f32)
    # w2_ref: (1, hidden)     fc2 weight row (f32)
    # b2_ref: (1, 1) in SMEM  fc2 bias scalar
    # o_ref : (TB, 1)         per-row value
    # fc1 on the MXU; accumulate in f32 regardless of the streaming dtype.
    h = jnp.dot(x_ref[...], w1_ref[...], preferred_element_type=jnp.float32)
    h = jnp.maximum(h + b1_ref[...], 0.0)  # bias + ReLU on the VPU (f32)
    # Dropout(p=0.1) is identity in inference mode (module.eval()).
    # TODO(synk): training-mode dropout would need pltpu.prng_random_bits + mask/scale.
    # fc2 (N=1): VPU multiply + lane reduction over hidden -- keeps the MXU free for
    # the next tile's fc1 and avoids a second MXU result drain.
    out = jnp.sum(h * w2_ref[...], axis=1, keepdims=True) + b2_ref[0, 0]
    o_ref[...] = out.astype(o_ref.dtype)


def value_network_forward(x, w1, b1, w2, b2, *, tile_b=None):
    """Inference forward pass of ValueNetwork.

    x : [B, input_size] (f32 or bf16; bf16 halves the dominant HBM stream)
    w1: [hidden, input_size], b1: [hidden]   (PyTorch nn.Linear layouts)
    w2: [1, hidden],          b2: [1]
    returns [B, 1] float32.
    """
    batch, f_in = x.shape
    hidden = w1.shape[0]

    # Tiny weight relayouts (a few KB, once per call; negligible vs activation traffic).
    w1_t = jnp.transpose(w1).astype(x.dtype)             # (f_in, hidden) for plain MXU dot
    b1_row = b1.reshape(1, hidden).astype(jnp.float32)   # keep epilogue in f32
    w2_row = w2.reshape(1, hidden).astype(jnp.float32)
    b2_s = b2.reshape(1, 1).astype(jnp.float32)

    tb = _choose_tile_b(batch, f_in, x.dtype.itemsize, tile_b)
    num_tiles = _cdiv(batch, tb)
    b_pad = num_tiles * tb  # only the OUTPUT allocation is padded; x is not copied

    flops = 2 * b_pad * hidden * (f_in + 1)
    bytes_accessed = (x.dtype.itemsize * (batch * f_in + f_in * hidden)
                      + 4 * (2 * hidden + 2) + 4 * b_pad)

    out = pl.pallas_call(
        value_net_kernel,
        out_shape=jax.ShapeDtypeStruct((b_pad, 1), jnp.float32),
        grid=(num_tiles,),
        in_specs=[
            pl.BlockSpec((tb, f_in), lambda i: (i, 0)),        # x tile (pipelined DMA)
            pl.BlockSpec((f_in, hidden), lambda i: (0, 0)),    # fc1 W^T (resident)
            pl.BlockSpec((1, hidden), lambda i: (0, 0)),       # fc1 bias row (resident)
            pl.BlockSpec((1, hidden), lambda i: (0, 0)),       # fc2 weight row (resident)
            pl.BlockSpec((1, 1), lambda i: (0, 0),
                         memory_space=pltpu.SMEM),             # fc2 bias scalar (SMEM)
        ],
        out_specs=pl.BlockSpec((tb, 1), lambda i: (i, 0)),
        compiler_params=pltpu.CompilerParams(
            dimension_semantics=("parallel",),
            vmem_limit_bytes=32 * 1024 * 1024),
        cost_estimate=pl.CostEstimate(
            flops=flops, transcendentals=0, bytes_accessed=bytes_accessed),
    )(x, w1_t, b1_row, w2_row, b2_s)

    # Drop the padded tail rows (garbage from the partial last input block).
    return out[:batch]


def init_params(key, input_size, hidden_size):
    """nn.Linear default init (U(+/- 1/sqrt(fan_in))) in PyTorch [out, in] layouts."""
    k1, k2, k3, k4 = jax.random.split(key, 4)
    lim1 = 1.0 / (input_size ** 0.5)
    lim2 = 1.0 / (hidden_size ** 0.5)
    w1 = jax.random.uniform(k1, (hidden_size, input_size), jnp.float32, -lim1, lim1)
    b1 = jax.random.uniform(k2, (hidden_size,), jnp.float32, -lim1, lim1)
    w2 = jax.random.uniform(k3, (1, hidden_size), jnp.float32, -lim2, lim2)
    b2 = jax.random.uniform(k4, (1,), jnp.float32, -lim2, lim2)
    return w1, b1, w2, b2


def _reference(x, w1, b1, w2, b2):
    # Pure-JAX reference (inference: dropout is identity).
    h = jnp.maximum(x @ w1.T + b1[None, :], 0.0)
    return h @ w2.T + b2[None, :]


if __name__ == "__main__":
    key = jax.random.PRNGKey(0)
    input_size, hidden_size = 16, 32
    kp, kx1, kx2, kx3 = jax.random.split(key, 4)
    w1, b1, w2, b2 = init_params(kp, input_size, hidden_size)

    # Tiny batch: single full block, no padding anywhere.
    x_small = jax.random.normal(kx1, (8, input_size), jnp.float32)
    out_small = jax.block_until_ready(value_network_forward(x_small, w1, b1, w2, b2))
    assert out_small.shape == (8, 1)
    assert jnp.allclose(out_small, _reference(x_small, w1, b1, w2, b2),
                        atol=1e-4, rtol=1e-4)

    # Batch not a multiple of 8: exercises the partial (OOB-padded) input block.
    x_mid = jax.random.normal(kx2, (700, input_size), jnp.float32)
    out_mid = jax.block_until_ready(value_network_forward(x_mid, w1, b1, w2, b2))
    assert out_mid.shape == (700, 1)
    assert jnp.allclose(out_mid, _reference(x_mid, w1, b1, w2, b2),
                        atol=1e-4, rtol=1e-4)

    # Larger batch in bf16: multi-tile grid (>=2 steps for v7x megacore) plus the
    # halved-HBM-traffic activation path; f32 accumulation keeps error small.
    x_big = jax.random.normal(kx3, (2176, input_size), jnp.float32)
    out_big = jax.block_until_ready(
        value_network_forward(x_big.astype(jnp.bfloat16), w1, b1, w2, b2))
    assert out_big.shape == (2176, 1)
    assert jnp.allclose(out_big, _reference(x_big, w1, b1, w2, b2),
                        atol=3e-2, rtol=3e-2)

    print("KERNEL_OK")
</pallas_src>

<mosaic_0001>
module attributes {stable_mosaic.version = 11 : i64} {
  func.func @value_net_kernel(%arg0: i32, %arg1: memref<8x16xf32, #tpu.memory_space<vmem>>, %arg2: memref<16x32xf32, #tpu.memory_space<vmem>>, %arg3: memref<1x32xf32, #tpu.memory_space<vmem>>, %arg4: memref<1x32xf32, #tpu.memory_space<vmem>>, %arg5: memref<1x1xf32, #tpu.memory_space<smem>>, %arg6: memref<8x1xf32, #tpu.memory_space<vmem>>) attributes {dimension_semantics = [#tpu.dimension_semantics<parallel>], iteration_bounds = array<i64: 1>, scalar_prefetch = 0 : i64, scratch_operands = 0 : i64, tpu.core_type = #tpu.core_type<tc>, window_params = [{transform_indices = @transform_0, window_bounds = array<i64: 8, 16>}, {pipeline_mode = #tpu.pipeline_mode<synchronous>, transform_indices = @transform_1, window_bounds = array<i64: 16, 32>}, {pipeline_mode = #tpu.pipeline_mode<synchronous>, transform_indices = @transform_2, window_bounds = array<i64: 1, 32>}, {pipeline_mode = #tpu.pipeline_mode<synchronous>, transform_indices = @transform_3, window_bounds = array<i64: 1, 32>}, {transform_indices = @transform_4, window_bounds = array<i64: 1, 1>}, {transform_indices = @transform_5, window_bounds = array<i64: 8, 1>}]} {
    %c0 = arith.constant 0 : index
    %c0_0 = arith.constant 0 : index
    %0 = vector.load %arg1[%c0, %c0_0] : memref<8x16xf32, #tpu.memory_space<vmem>>, vector<8x16xf32>
    %c0_1 = arith.constant 0 : index
    %c0_2 = arith.constant 0 : index
    %1 = vector.load %arg2[%c0_1, %c0_2] : memref<16x32xf32, #tpu.memory_space<vmem>>, vector<16x32xf32>
    %cst = arith.constant dense<0.000000e+00> : vector<8x32xf32>
    %2 = tpu.matmul %0, %1, %cst {dimension_numbers = #tpu.dot_dimension_numbers<[1], [0], [0], [1], [0, 0, 1, 1], [], []>} : vector<8x16xf32>, vector<16x32xf32>, vector<8x32xf32> -> vector<8x32xf32>
    %c0_3 = arith.constant 0 : index
    %c0_4 = arith.constant 0 : index
    %3 = vector.load %arg3[%c0_3, %c0_4] : memref<1x32xf32, #tpu.memory_space<vmem>>, vector<1x32xf32>
    %4 = vector.broadcast %3 : vector<1x32xf32> to vector<8x32xf32>
    %5 = arith.addf %2, %4 : vector<8x32xf32>
    %cst_5 = arith.constant 0.000000e+00 : f32
    %6 = vector.broadcast %cst_5 : f32 to vector<8x32xf32>
    %7 = arith.maximumf %5, %6 : vector<8x32xf32>
    %c0_6 = arith.constant 0 : index
    %c0_7 = arith.constant 0 : index
    %8 = vector.load %arg4[%c0_6, %c0_7] : memref<1x32xf32, #tpu.memory_space<vmem>>, vector<1x32xf32>
    %9 = vector.broadcast %8 : vector<1x32xf32> to vector<8x32xf32>
    %10 = arith.mulf %7, %9 : vector<8x32xf32>
    %cst_8 = arith.constant dense<0.000000e+00> : vector<8xf32>
    %11 = vector.multi_reduction <add>, %10, %cst_8 [1] : vector<8x32xf32> to vector<8xf32>
    %12 = vector.shape_cast %11 : vector<8xf32> to vector<8x1xf32>
    %c0_9 = arith.constant 0 : index
    %c0_10 = arith.constant 0 : index
    %13 = memref.load %arg5[%c0_9, %c0_10] : memref<1x1xf32, #tpu.memory_space<smem>>
    %14 = vector.broadcast %13 : f32 to vector<8x1xf32>
    %15 = arith.addf %12, %14 : vector<8x1xf32>
    %c0_11 = arith.constant 0 : index
    %c0_12 = arith.constant 0 : index
    %16 = vector.load %arg6[%c0_11, %c0_12] : memref<8x1xf32, #tpu.memory_space<vmem>>, vector<8x1xf32>
    tpu.vector_store %arg6[%c0_11, %c0_12], %15 {strides = array<i32>} : memref<8x1xf32, #tpu.memory_space<vmem>>, vector<8x1xf32>,
    return
  }
  func.func @transform_0(%arg0: i32) -> (i32, i32) {
    %c0_i32 = arith.constant 0 : i32
    %c0_i32_0 = arith.constant 0 : i32
    return %arg0, %c0_i32 : i32, i32
  }
  func.func @transform_1(%arg0: i32) -> (i32, i32) {
    %c0_i32 = arith.constant 0 : i32
    %c0_i32_0 = arith.constant 0 : i32
    %c0_i32_1 = arith.constant 0 : i32
    return %c0_i32, %c0_i32_0 : i32, i32
  }
  func.func @transform_2(%arg0: i32) -> (i32, i32) {
    %c0_i32 = arith.constant 0 : i32
    %c0_i32_0 = arith.constant 0 : i32
    %c0_i32_1 = arith.constant 0 : i32
    return %c0_i32, %c0_i32_0 : i32, i32
  }
  func.func @transform_3(%arg0: i32) -> (i32, i32) {
    %c0_i32 = arith.constant 0 : i32
    %c0_i32_0 = arith.constant 0 : i32
    %c0_i32_1 = arith.constant 0 : i32
    return %c0_i32, %c0_i32_0 : i32, i32
  }
  func.func @transform_4(%arg0: i32) -> (i32, i32) {
    %c0_i32 = arith.constant 0 : i32
    %c0_i32_0 = arith.constant 0 : i32
    %c0_i32_1 = arith.constant 0 : i32
    return %c0_i32, %c0_i32_0 : i32, i32
  }
  func.func @transform_5(%arg0: i32) -> (i32, i32) {
    %c0_i32 = arith.constant 0 : i32
    %c0_i32_0 = arith.constant 0 : i32
    return %arg0, %c0_i32 : i32, i32
  }
}

</mosaic_0001>

<llo_original>
// kernel: tpu_custom_call.1
$region0: #{tpu_custom_call.1}
  #allocation0 [shape = 'u32[]', space=smem, size = 0x4, offset = 0x4, fixed_abs, tag = 'smem constant byte address 0x4 - core index']
  #allocation1 [shape = 'u32[144,128]{1,0:T(1,128)}', space=vmem, size = 0x12000, scoped, tag = 'internal scratch']
  #allocation2 [shape = 'f32[1,1]{1,0:T(1,128)S(6)}', space=smem, size = 0x200, scoped, tag = 'scoped memory for tpu_custom_call.1']
  %s0 = inlined_call_operand.hbm [shape: f32[8,16], index: 0, kind: input, shape index: {}]
  %s1 = inlined_call_operand.hbm [shape: f32[16,32], index: 1, kind: input, shape index: {}]
  %s2 = inlined_call_operand.vmem [shape: f32[1,32], index: 2, kind: input, shape index: {}]
  %s3 = inlined_call_operand.vmem [shape: f32[1,32], index: 3, kind: input, shape index: {}]
  %s4 = inlined_call_operand.<no memory space> [shape: f32[1,1], index: 4, kind: input, shape index: {}]
  %s5 = inlined_call_operand.vmem [shape: f32[8,1], index: 5, kind: output, shape index: {}]
  %s6 = sld [smem:[#allocation0]]
  $region38: #{tpu_custom_call.1} parent=0
    _
  %s8 = ssub.s32 1, %s6
  %s9 = scalar_select 0, %s8, %s6
  %10 = sst [smem:[#allocation2]] %s4
  $region1: #{tpu_custom_call.1} parent=0
    #allocation3 [shape = 'u8[4096]{0}', space=vmem, size = 0x1000, scoped, tag = 'input window, operand 0, single buffered']
    #allocation4 [shape = 's32[1]{0}', space=sflag, size = 0x4, scoped, tag = 'scoped memory for tpu_custom_call.1']
    #allocation5 [shape = 'u8[8192]{0}', space=vmem, size = 0x2000, scoped, tag = 'input window, operand 1, single buffered']
    #allocation6 [shape = 's32[1]{0}', space=sflag, size = 0x4, scoped, tag = 'scoped memory for tpu_custom_call.1']
    %11 = vsyncpa [#allocation4], 0
    %12 = vsyncpa [#allocation6], 0
    // Predicated region
    $region2: #{tpu_custom_call.1} parent=1 // pred_check
      _
    $region3: #{tpu_custom_call.1} parent=1 // pred_check_branch
      %14 = sbr.rel (0) target = $region5
    $region4: #{tpu_custom_call.1} parent=1 // pred_region
      %s16 = ssub.s32 128, 128
      %17 = vsyncadd [#allocation4], %s16
      %s19 = sshll.u32 [#allocation3], 4
      %s20 = int_to_ptr.vmem [resolvable:$true] %s19
      %22 = dma.hbm_to_vmem [thread:$0]  %s0, 128, %s20, [#allocation4]
    $region5: #{tpu_custom_call.1} parent=1 // pred_fallthru
      _
    // Predicated region
    $region6: #{tpu_custom_call.1} parent=1 // pred_check
      _
    $region7: #{tpu_custom_call.1} parent=1 // pred_check_branch
      %24 = sbr.rel (0) target = $region9
    $region8: #{tpu_custom_call.1} parent=1 // pred_region
      %s26 = ssub.s32 256, 256
      %27 = vsyncadd [#allocation6], %s26
      %s28 = sshll.u32 [#allocation5], 4
      %s29 = int_to_ptr.vmem [resolvable:$true] %s28
      %34 = dma.hbm_to_vmem [thread:$0]  %s1, 256, %s29, [#allocation6], 128, 128, 8
    $region9: #{tpu_custom_call.1} parent=1 // pred_fallthru
      _
    // Predicated region
    $region10: #{tpu_custom_call.1} parent=1 // pred_check
      _
    $region11: #{tpu_custom_call.1} parent=1 // pred_check_branch
      %36 = sbr.rel (0) target = $region13
    $region12: #{tpu_custom_call.1} parent=1 // pred_region
      _
    $region13: #{tpu_custom_call.1} parent=1 // pred_fallthru
      _
    // Predicated region
    $region14: #{tpu_custom_call.1} parent=1 // pred_check
      _
    $region15: #{tpu_custom_call.1} parent=1 // pred_check_branch
      %38 = sbr.rel (0) target = $region17
    $region16: #{tpu_custom_call.1} parent=1 // pred_region
      _
    $region17: #{tpu_custom_call.1} parent=1 // pred_fallthru
      _
    // Predicated region
    $region18: #{tpu_custom_call.1} parent=1 // pred_check
      _
    $region19: #{tpu_custom_call.1} parent=1 // pred_check_branch
      %40 = sbr.rel (0) target = $region21
    $region20: #{tpu_custom_call.1} parent=1 // pred_region
      _
    $region21: #{tpu_custom_call.1} parent=1 // pred_fallthru
      _
    // Predicated region
    $region22: #{tpu_custom_call.1} parent=1 // pred_check
      _
    $region23: #{tpu_custom_call.1} parent=1 // pred_check_branch
      %42 = sbr.rel (0) target = $region25
    $region24: #{tpu_custom_call.1} parent=1 // pred_region
      %43 = dma.done [#allocation4], 128
    $region25: #{tpu_custom_call.1} parent=1 // pred_fallthru
      _
    // Predicated region
    $region26: #{tpu_custom_call.1} parent=1 // pred_check
      _
    $region27: #{tpu_custom_call.1} parent=1 // pred_check_branch
      %45 = sbr.rel (0) target = $region29
    $region28: #{tpu_custom_call.1} parent=1 // pred_region
      %46 = dma.done [#allocation6], 256
    $region29: #{tpu_custom_call.1} parent=1 // pred_fallthru
      _
    %v47 = vld [vmem:[#allocation3] sm:$0xff]
    %v48 = vld [vmem:[#allocation5] sm:$0xff]
    %v49 = vld [vmem:[#allocation5 + $0x8] sm:$0xff]
    %v50 = vld [vmem:[%s2] sm:$0x1]
    %v52 = vlaneseq
    %v53 = vshrl.u32 %v52, 7
    %v54 = vsub.s32 0, %v53
    %v55 = vrot.slane %v50, %v54
    %vm57 = vcmask 130048
    %v59 = vsel %vm57, %v47, 0
    %61 = vmatprep.subr.mxu0 0.0
    %62 = vmatpush1.msra.mxu0 %v48
    %63 = vmatprep.subr.mxu0 0.0
    %64 = vmatpush1.msra.mxu0 %v49
    %65 = vmatprep.subr.mxu0 0.0
    %66 = vmatpush1.msra.mxu0 0.0
    %67 = vmatprep.subr.mxu0 0.0
    %68 = vmatpush1.msra.mxu0 0.0
    %69 = vmatprep.subr.mxu0 0.0
    %70 = vmatpush1.msra.mxu0 0.0
    %71 = vmatprep.subr.mxu0 0.0
    %72 = vmatpush1.msra.mxu0 0.0
    %73 = vmatprep.subr.mxu0 0.0
    %74 = vmatpush1.msra.mxu0 0.0
    %75 = vmatprep.subr.mxu0 0.0
    %76 = vmatpush1.msra.mxu0 0.0
    %77 = vmatprep.subr.mxu0 0.0
    %78 = vmatpush1.msra.mxu0 0.0
    %79 = vmatprep.subr.mxu0 0.0
    %80 = vmatpush1.msra.mxu0 0.0
    %81 = vmatprep.subr.mxu0 0.0
    %82 = vmatpush1.msra.mxu0 0.0
    %83 = vmatprep.subr.mxu0 0.0
    %84 = vmatpush1.msra.mxu0 0.0
    %85 = vmatprep.subr.mxu0 0.0
    %86 = vmatpush1.msra.mxu0 0.0
    %87 = vmatprep.subr.mxu0 0.0
    %88 = vmatpush1.msra.mxu0 0.0
    %89 = vmatprep.subr.mxu0 0.0
    %90 = vmatpush1.msra.mxu0 0.0
    %91 = vmatprep.subr.mxu0 0.0
    %92 = vmatpush1.msra.mxu0 0.0
    %93 = vmatprep.subr.mxu0 0.0
    %94 = vmatpush1.msra.mxu0 0.0
    %95 = vmatprep.subr.mxu0 0.0
    %96 = vmatpush1.msra.mxu0 0.0
    %97 = vmatprep.subr.mxu0 0.0
    %98 = vmatpush1.msra.mxu0 0.0
    %99 = vmatprep.subr.mxu0 0.0
    %100 = vmatpush1.msra.mxu0 0.0
    %101 = vmatprep.subr.mxu0 0.0
    %102 = vmatpush1.msra.mxu0 0.0
    %103 = vmatprep.subr.mxu0 0.0
    %104 = vmatpush1.msra.mxu0 0.0
    %105 = vmatprep.subr.mxu0 0.0
    %106 = vmatpush1.msra.mxu0 0.0
    %107 = vmatprep.subr.mxu0 0.0
    %108 = vmatpush1.msra.mxu0 0.0
    %109 = vmatprep.subr.mxu0 0.0
    %110 = vmatpush1.msra.mxu0 0.0
    %111 = vmatprep.subr.mxu0 0.0
    %112 = vmatpush1.msra.mxu0 0.0
    %113 = vmatprep.subr.mxu0 0.0
    %114 = vmatpush1.msra.mxu0 0.0
    %115 = vmatprep.subr.mxu0 0.0
    %116 = vmatpush1.msra.mxu0 0.0
    %117 = vmatprep.subr.mxu0 0.0
    %118 = vmatpush1.msra.mxu0 0.0
    %119 = vmatprep.subr.mxu0 0.0
    %120 = vmatpush1.msra.mxu0 0.0
    %121 = vmatprep.subr.mxu0 0.0
    %122 = vmatpush1.msra.mxu0 0.0
    %123 = vmatprep.subr.mxu0 0.0
    %124 = vmatpush1.msra.mxu0 0.0
    %125 = vmatprep.mubr.f32.mxu0 0.0
    %126 = vmatmul.mubr.f32.gmra.mrb[0].mxu0 %v59
    %v127 = vpop.f32.mrb[0].mxu0
    %v128 = vadd.f32 %v55, %v127
    %v129 = vpop.f32.mrb[0].mxu0
    %130 = vdwg.mxu0
    %v131 = vmax.f32 %v128, 0.0
    %v132 = vld [vmem:[%s3] sm:$0x1]
    %v134 = vlaneseq
    %v135 = vshrl.u32 %v134, 7
    %v136 = vsub.s32 0, %v135
    %v137 = vrot.slane %v132, %v136
    %v139 = vmul.f32 %v131, %v137
    %vm140 = vcmask 261120
    %v141 = vsel %vm140, %v139, 0.0
    %142 = vadd.xlane.f32.xlu0 %v141
    %v143 = vpop.xlane.xlu0 %142
    %s144 = sld [smem:[#allocation2]]
    %v145 = vstv %s144
    %v146 = vadd.f32 %v143, %v145
    %vm147 = vcmask 7168
    %148 = vst.msk [vmem:[%s5] sm:$0xff] %vm147, %v146
    // Predicated region
    $region30: #{tpu_custom_call.1} parent=1 // pred_check
      _
    $region31: #{tpu_custom_call.1} parent=1 // pred_check_branch
      %150 = sbr.rel (0) target = $region33
    $region32: #{tpu_custom_call.1} parent=1 // pred_region
      _
    $region33: #{tpu_custom_call.1} parent=1 // pred_fallthru
      _
    // Predicated region
    $region34: #{tpu_custom_call.1} parent=1 // pred_check
      _
    $region35: #{tpu_custom_call.1} parent=1 // pred_check_branch
      %152 = sbr.rel (0) target = $region37
    $region36: #{tpu_custom_call.1} parent=1 // pred_region
      _
    $region37: #{tpu_custom_call.1} parent=1 // pred_fallthru
      _
    %153 = vsyncpa [#allocation4], 1
    %154 = vsyncpa [#allocation6], 1

</llo_original>
